<compile_context>
chip_gen: v7x
topology: tpu7x:2x2x1
jax: 0.10.0
libtpu: 0.0.40
codegen_flags: <defaults>
</compile_context>

<pallas_src>
import functools

import jax
import jax.numpy as jnp
from jax import lax
from jax.experimental import pallas as pl
from jax.experimental.pallas import tpu as pltpu


def _stable_softplus(x):
    # log1p(exp(x)) computed without overflow for large positive x.
    return jnp.maximum(x, 0.0) + jnp.log1p(jnp.exp(-jnp.abs(x)))


def bbb_linear_kernel(x_ref, wmu_ref, wrho_ref, weps_ref, bias_ref,
                      o_ref, w_smp_ref, b_smp_ref, *, compute_dtype):
    b_idx = pl.program_id(1)  # batch-tile index (innermost grid axis)

    # Sample the reparameterized weight / bias once per output tile and cache in VMEM;
    # all batch tiles of this output tile reuse it (softplus runs once, not per batch tile).
    @pl.when(b_idx == 0)
    def _sample():
        w_sigma = _stable_softplus(wrho_ref[...])                       # f32 math
        w = wmu_ref[...] + weps_ref[...] * w_sigma                      # (TO, I)
        w_smp_ref[...] = w.astype(w_smp_ref.dtype)
        b_mu = bias_ref[0:1, :]
        b_rho = bias_ref[1:2, :]
        b_eps = bias_ref[2:3, :]
        b_smp_ref[...] = b_mu + b_eps * _stable_softplus(b_rho)         # (1, TO)

    x = x_ref[...].astype(compute_dtype)                                # (TB, I)
    w = w_smp_ref[...]                                                  # (TO, I)
    # out[b, o] = sum_i x[b, i] * weight[o, i]  ==  x @ weight.T, expressed without
    # materializing a transpose (contraction on dim 1 of both operands).
    acc = lax.dot_general(x, w, dimension_numbers=(((1,), (1,)), ((), ())),
                          preferred_element_type=jnp.float32)           # (TB, TO) f32
    o_ref[...] = (acc + b_smp_ref[...]).astype(o_ref.dtype)


def _round_up(n, m):
    return ((n + m - 1) // m) * m


def _pick_tiles(B, O, I_p, compute_bytes, budget=40 * 1024 * 1024):
    """Pick (TB, TO) keeping per-step double-buffered VMEM under `budget` bytes."""
    TB = min(256, _round_up(B, 8))
    TO = min(256, _round_up(O, 128))

    def est(tb, to):
        x_b = tb * I_p * 4
        w_b = 3 * to * I_p * 4            # W_mu, W_rho, W_eps tiles
        bias_b = 3 * to * 4
        out_b = tb * to * 4
        scratch = to * I_p * compute_bytes + 8 * to * 4
        return 2 * (x_b + w_b + bias_b + out_b) + scratch

    while est(TB, TO) > budget and TO > 128:
        TO //= 2
    while est(TB, TO) > budget and TB > 8:
        TB //= 2
    return TB, TO


def bbb_linear_forward(x, W_mu, W_rho, W_eps, bias_mu, bias_rho, bias_eps,
                       *, compute_dtype=jnp.float32):
    """x: (B, in_features); W_*: (out_features, in_features); bias_*: (out_features,)."""
    B, I = x.shape
    O, _ = W_mu.shape
    compute_bytes = jnp.dtype(compute_dtype).itemsize

    I_p = _round_up(I, 128)
    TB, TO = _pick_tiles(B, O, I_p, compute_bytes)
    B_p = _round_up(B, TB)
    O_p = _round_up(O, TO)

    # Zero-padding is exact: padded W_mu == W_eps == 0 -> sampled padded weight == 0,
    # padded x columns == 0, and padded output rows/cols are sliced away below.
    x_p = jnp.pad(x, ((0, B_p - B), (0, I_p - I)))
    wmu_p = jnp.pad(W_mu, ((0, O_p - O), (0, I_p - I)))
    wrho_p = jnp.pad(W_rho, ((0, O_p - O), (0, I_p - I)))
    weps_p = jnp.pad(W_eps, ((0, O_p - O), (0, I_p - I)))
    bias_pack = jnp.stack([
        jnp.pad(bias_mu, (0, O_p - O)),
        jnp.pad(bias_rho, (0, O_p - O)),
        jnp.pad(bias_eps, (0, O_p - O)),
    ])  # (3, O_p): single lane-dense bias input instead of three (1, O) ones

    grid = (O_p // TO, B_p // TB)  # out-feature tiles outer, batch tiles inner

    kernel = functools.partial(bbb_linear_kernel, compute_dtype=compute_dtype)
    out_p = pl.pallas_call(
        kernel,
        out_shape=jax.ShapeDtypeStruct((B_p, O_p), x.dtype),
        grid_spec=pltpu.PrefetchScalarGridSpec(
            num_scalar_prefetch=0,
            grid=grid,
            in_specs=[
                pl.BlockSpec((TB, I_p), lambda o, b: (b, 0)),   # x
                pl.BlockSpec((TO, I_p), lambda o, b: (o, 0)),   # W_mu
                pl.BlockSpec((TO, I_p), lambda o, b: (o, 0)),   # W_rho
                pl.BlockSpec((TO, I_p), lambda o, b: (o, 0)),   # W_eps
                pl.BlockSpec((3, TO),   lambda o, b: (0, o)),   # packed bias (mu,rho,eps)
            ],
            out_specs=pl.BlockSpec((TB, TO), lambda o, b: (b, o)),
            scratch_shapes=[
                pltpu.VMEM((TO, I_p), compute_dtype),   # cached sampled weight tile
                pltpu.VMEM((1, TO), jnp.float32),       # cached sampled bias tile
            ],
        ),
        compiler_params=pltpu.CompilerParams(
            dimension_semantics=("parallel", "arbitrary"),
            vmem_limit_bytes=64 * 1024 * 1024,
        ),
    )(x_p, wmu_p, wrho_p, weps_p, bias_pack)

    return out_p[:B, :O]


def _reference(x, W_mu, W_rho, W_eps, bias_mu, bias_rho, bias_eps):
    w_sigma = jnp.log1p(jnp.exp(W_rho))
    weight = W_mu + W_eps * w_sigma
    b_sigma = jnp.log1p(jnp.exp(bias_rho))
    bias = bias_mu + bias_eps * b_sigma
    return x @ weight.T + bias


def _make_inputs(key, batch, in_features, out_features):
    ks = jax.random.split(key, 7)
    # Deterministic init matching reset_parameters(): mu ~ N(0, 0.1), rho ~ N(-3, 0.1).
    x = jax.random.normal(ks[0], (batch, in_features), jnp.float32)
    W_mu = 0.1 * jax.random.normal(ks[1], (out_features, in_features), jnp.float32)
    W_rho = -3.0 + 0.1 * jax.random.normal(ks[2], (out_features, in_features), jnp.float32)
    bias_mu = 0.1 * jax.random.normal(ks[3], (out_features,), jnp.float32)
    bias_rho = -3.0 + 0.1 * jax.random.normal(ks[4], (out_features,), jnp.float32)
    # eps ~ N(0, 1) draws (torch.empty(...).normal_(0, 1)), deterministic here.
    W_eps = jax.random.normal(ks[5], (out_features, in_features), jnp.float32)
    bias_eps = jax.random.normal(ks[6], (out_features,), jnp.float32)
    return x, W_mu, W_rho, W_eps, bias_mu, bias_rho, bias_eps


if __name__ == "__main__":
    key = jax.random.PRNGKey(0)
    k1, k2 = jax.random.split(key)

    # Small shapes consistent with an nn.Linear-style module.
    args = _make_inputs(k1, 8, 32, 16)
    out = jax.block_until_ready(bbb_linear_forward(*args))
    ref = _reference(*args)
    assert out.shape == (8, 16)
    assert jnp.allclose(out, ref, atol=1e-5, rtol=1e-5), "f32 mismatch vs reference"

    # Exercise the multi-tile grid, padding, and the pl.when weight-cache path.
    args2 = _make_inputs(k2, 300, 200, 260)
    out2 = jax.block_until_ready(bbb_linear_forward(*args2))
    ref2 = _reference(*args2)
    assert out2.shape == (300, 260)
    assert jnp.allclose(out2, ref2, atol=1e-4, rtol=1e-4), "tiled f32 mismatch vs reference"

    # Optional bf16 MXU inputs (f32 accumulation) — the v6e/v7x fast path.
    out_bf16 = jax.block_until_ready(
        bbb_linear_forward(*args, compute_dtype=jnp.bfloat16))
    assert jnp.allclose(out_bf16, ref, atol=5e-2, rtol=5e-2), "bf16 mismatch vs reference"

    print("KERNEL_OK")
</pallas_src>

<mosaic_0001>
module attributes {stable_mosaic.version = 11 : i64} {
  func.func @bbb_linear_kernel(%arg0: i32, %arg1: i32, %arg2: memref<8x128xf32, #tpu.memory_space<vmem>>, %arg3: memref<128x128xf32, #tpu.memory_space<vmem>>, %arg4: memref<128x128xf32, #tpu.memory_space<vmem>>, %arg5: memref<128x128xf32, #tpu.memory_space<vmem>>, %arg6: memref<3x128xf32, #tpu.memory_space<vmem>>, %arg7: memref<8x128xf32, #tpu.memory_space<vmem>>, %arg8: memref<128x128xf32, #tpu.memory_space<vmem>>, %arg9: memref<1x128xf32, #tpu.memory_space<vmem>>) attributes {dimension_semantics = [#tpu.dimension_semantics<parallel>, #tpu.dimension_semantics<arbitrary>], iteration_bounds = array<i64: 1, 1>, scalar_prefetch = 0 : i64, scratch_operands = 2 : i64, tpu.core_type = #tpu.core_type<tc>, window_params = [{transform_indices = @transform_0, window_bounds = array<i64: 8, 128>}, {transform_indices = @transform_1, window_bounds = array<i64: 128, 128>}, {transform_indices = @transform_2, window_bounds = array<i64: 128, 128>}, {transform_indices = @transform_3, window_bounds = array<i64: 128, 128>}, {transform_indices = @transform_4, window_bounds = array<i64: 3, 128>}, {transform_indices = @transform_5, window_bounds = array<i64: 8, 128>}]} {
    %c0_i32 = arith.constant 0 : i32
    %0 = arith.cmpi eq, %arg1, %c0_i32 : i32
    %1 = arith.extui %0 : i1 to i32
    %c0_i32_0 = arith.constant 0 : i32
    %2 = arith.cmpi ne, %1, %c0_i32_0 : i32
    scf.if %2 {
      %c0_8 = arith.constant 0 : index
      %c0_9 = arith.constant 0 : index
      %10 = vector.load %arg4[%c0_8, %c0_9] : memref<128x128xf32, #tpu.memory_space<vmem>>, vector<128x128xf32>
      %cst_10 = arith.constant 0.000000e+00 : f32
      %11 = vector.broadcast %cst_10 : f32 to vector<128x128xf32>
      %12 = arith.maximumf %10, %11 : vector<128x128xf32>
      %13 = math.absf %10 : vector<128x128xf32>
      %cst_11 = arith.constant 0.000000e+00 : f32
      %14 = vector.broadcast %cst_11 : f32 to vector<128x128xf32>
      %15 = arith.subf %14, %13 : vector<128x128xf32>
      %16 = math.exp %15 : vector<128x128xf32>
      %17 = math.log1p %16 : vector<128x128xf32>
      %18 = arith.addf %12, %17 : vector<128x128xf32>
      %c0_12 = arith.constant 0 : index
      %c0_13 = arith.constant 0 : index
      %19 = vector.load %arg3[%c0_12, %c0_13] : memref<128x128xf32, #tpu.memory_space<vmem>>, vector<128x128xf32>
      %c0_14 = arith.constant 0 : index
      %c0_15 = arith.constant 0 : index
      %20 = vector.load %arg5[%c0_14, %c0_15] : memref<128x128xf32, #tpu.memory_space<vmem>>, vector<128x128xf32>
      %21 = arith.mulf %20, %18 : vector<128x128xf32>
      %22 = arith.addf %19, %21 : vector<128x128xf32>
      %c0_16 = arith.constant 0 : index
      %c0_17 = arith.constant 0 : index
      %23 = vector.load %arg8[%c0_16, %c0_17] : memref<128x128xf32, #tpu.memory_space<vmem>>, vector<128x128xf32>
      tpu.vector_store %arg8[%c0_16, %c0_17], %22 {strides = array<i32>} : memref<128x128xf32, #tpu.memory_space<vmem>>, vector<128x128xf32>,
      %c0_18 = arith.constant 0 : index
      %c0_19 = arith.constant 0 : index
      %24 = vector.load %arg6[%c0_18, %c0_19] : memref<3x128xf32, #tpu.memory_space<vmem>>, vector<1x128xf32>
      %c1 = arith.constant 1 : index
      %c0_20 = arith.constant 0 : index
      %25 = vector.load %arg6[%c1, %c0_20] : memref<3x128xf32, #tpu.memory_space<vmem>>, vector<1x128xf32>
      %c2 = arith.constant 2 : index
      %c0_21 = arith.constant 0 : index
      %26 = vector.load %arg6[%c2, %c0_21] : memref<3x128xf32, #tpu.memory_space<vmem>>, vector<1x128xf32>
      %cst_22 = arith.constant 0.000000e+00 : f32
      %27 = vector.broadcast %cst_22 : f32 to vector<1x128xf32>
      %28 = arith.maximumf %25, %27 : vector<1x128xf32>
      %29 = math.absf %25 : vector<1x128xf32>
      %cst_23 = arith.constant 0.000000e+00 : f32
      %30 = vector.broadcast %cst_23 : f32 to vector<1x128xf32>
      %31 = arith.subf %30, %29 : vector<1x128xf32>
      %32 = math.exp %31 : vector<1x128xf32>
      %33 = math.log1p %32 : vector<1x128xf32>
      %34 = arith.addf %28, %33 : vector<1x128xf32>
      %35 = arith.mulf %26, %34 : vector<1x128xf32>
      %36 = arith.addf %24, %35 : vector<1x128xf32>
      %c0_24 = arith.constant 0 : index
      %c0_25 = arith.constant 0 : index
      %37 = vector.load %arg9[%c0_24, %c0_25] : memref<1x128xf32, #tpu.memory_space<vmem>>, vector<1x128xf32>
      tpu.vector_store %arg9[%c0_24, %c0_25], %36 {strides = array<i32>} : memref<1x128xf32, #tpu.memory_space<vmem>>, vector<1x128xf32>,
    } else {
    }
    %c0 = arith.constant 0 : index
    %c0_1 = arith.constant 0 : index
    %3 = vector.load %arg2[%c0, %c0_1] : memref<8x128xf32, #tpu.memory_space<vmem>>, vector<8x128xf32>
    %c0_2 = arith.constant 0 : index
    %c0_3 = arith.constant 0 : index
    %4 = vector.load %arg8[%c0_2, %c0_3] : memref<128x128xf32, #tpu.memory_space<vmem>>, vector<128x128xf32>
    %cst = arith.constant dense<0.000000e+00> : vector<8x128xf32>
    %5 = tpu.matmul %3, %4, %cst {dimension_numbers = #tpu.dot_dimension_numbers<[1], [1], [0], [0], [0, 0, 1, 0], [], []>} : vector<8x128xf32>, vector<128x128xf32>, vector<8x128xf32> -> vector<8x128xf32>
    %c0_4 = arith.constant 0 : index
    %c0_5 = arith.constant 0 : index
    %6 = vector.load %arg9[%c0_4, %c0_5] : memref<1x128xf32, #tpu.memory_space<vmem>>, vector<1x128xf32>
    %7 = vector.broadcast %6 : vector<1x128xf32> to vector<8x128xf32>
    %8 = arith.addf %5, %7 : vector<8x128xf32>
    %c0_6 = arith.constant 0 : index
    %c0_7 = arith.constant 0 : index
    %9 = vector.load %arg7[%c0_6, %c0_7] : memref<8x128xf32, #tpu.memory_space<vmem>>, vector<8x128xf32>
    tpu.vector_store %arg7[%c0_6, %c0_7], %8 {strides = array<i32>} : memref<8x128xf32, #tpu.memory_space<vmem>>, vector<8x128xf32>,
    return
  }
  func.func @transform_0(%arg0: i32, %arg1: i32) -> (i32, i32) {
    %c0_i32 = arith.constant 0 : i32
    %c0_i32_0 = arith.constant 0 : i32
    return %arg1, %c0_i32 : i32, i32
  }
  func.func @transform_1(%arg0: i32, %arg1: i32) -> (i32, i32) {
    %c0_i32 = arith.constant 0 : i32
    %c0_i32_0 = arith.constant 0 : i32
    return %arg0, %c0_i32 : i32, i32
  }
  func.func @transform_2(%arg0: i32, %arg1: i32) -> (i32, i32) {
    %c0_i32 = arith.constant 0 : i32
    %c0_i32_0 = arith.constant 0 : i32
    return %arg0, %c0_i32 : i32, i32
  }
  func.func @transform_3(%arg0: i32, %arg1: i32) -> (i32, i32) {
    %c0_i32 = arith.constant 0 : i32
    %c0_i32_0 = arith.constant 0 : i32
    return %arg0, %c0_i32 : i32, i32
  }
  func.func @transform_4(%arg0: i32, %arg1: i32) -> (i32, i32) {
    %c0_i32 = arith.constant 0 : i32
    %c0_i32_0 = arith.constant 0 : i32
    return %c0_i32, %arg0 : i32, i32
  }
  func.func @transform_5(%arg0: i32, %arg1: i32) -> (i32, i32) {
    %c0_i32 = arith.constant 0 : i32
    return %arg1, %arg0 : i32, i32
  }
}

</mosaic_0001>

<llo_original>
// kernel: tpu_custom_call.1
$region0: #{tpu_custom_call.1}
  #allocation0 [shape = 'u32[]', space=smem, size = 0x4, offset = 0x4, fixed_abs, tag = 'smem constant byte address 0x4 - core index']
  #allocation1 [shape = 'u32[144,128]{1,0:T(1,128)}', space=vmem, size = 0x12000, scoped, tag = 'internal scratch']
  #allocation2 [shape = 'f32[128,128]{1,0:T(8,128)}', space=vmem, size = 0x10000, scoped, tag = 'scratch operand']
  #allocation3 [shape = 'f32[1,128]{1,0:T(1,128)}', space=vmem, size = 0x200, scoped, tag = 'scratch operand']
  %s0 = inlined_call_operand.hbm [shape: f32[8,128], index: 0, kind: input, shape index: {}]
  %s1 = inlined_call_operand.hbm [shape: f32[128,128], index: 1, kind: input, shape index: {}]
  %s2 = inlined_call_operand.hbm [shape: f32[128,128], index: 2, kind: input, shape index: {}]
  %s3 = inlined_call_operand.hbm [shape: f32[128,128], index: 3, kind: input, shape index: {}]
  %s4 = inlined_call_operand.hbm [shape: f32[3,128], index: 4, kind: input, shape index: {}]
  %s5 = inlined_call_operand.hbm [shape: f32[8,128], index: 5, kind: output, shape index: {}]
  %s6 = sld [smem:[#allocation0]]
  $region54: #{tpu_custom_call.1} parent=0
    _
  %s8 = ssub.s32 1, %s6
  %s9 = scalar_select 0, %s8, %s6
  $region1: #{tpu_custom_call.1} parent=0
    #allocation4 [shape = 'u8[4096]{0}', space=vmem, size = 0x1000, scoped, tag = 'input window, operand 0, single buffered']
    #allocation5 [shape = 's32[1]{0}', space=sflag, size = 0x4, scoped, tag = 'scoped memory for tpu_custom_call.1']
    #allocation6 [shape = 's32[1]{0}', space=sflag, size = 0x4, scoped, tag = 'scoped memory for tpu_custom_call.1']
    #allocation7 [shape = 'u8[65536]{0}', space=vmem, size = 0x10000, scoped, tag = 'input window, operand 1, single buffered']
    #allocation8 [shape = 's32[1]{0}', space=sflag, size = 0x4, scoped, tag = 'scoped memory for tpu_custom_call.1']
    #allocation9 [shape = 'u8[65536]{0}', space=vmem, size = 0x10000, scoped, tag = 'input window, operand 2, single buffered']
    #allocation10 [shape = 'u8[65536]{0}', space=vmem, size = 0x10000, scoped, tag = 'input window, operand 3, single buffered']
    #allocation11 [shape = 's32[1]{0}', space=sflag, size = 0x4, scoped, tag = 'scoped memory for tpu_custom_call.1']
    #allocation12 [shape = 'u8[2048]{0}', space=vmem, size = 0x800, scoped, tag = 'input window, operand 4, single buffered']
    #allocation13 [shape = 'u8[4096]{0}', space=vmem, size = 0x1000, scoped, tag = 'output window, operand 0, single buffered']
    %10 = vsyncpa [#allocation5], 0
    %11 = vsyncpa [#allocation8], 0
    %12 = vsyncpa [#allocation11], 0
    %13 = vsyncpa [#allocation6], 0
    // Predicated region
    $region2: #{tpu_custom_call.1} parent=1 // pred_check
      _
    $region3: #{tpu_custom_call.1} parent=1 // pred_check_branch
      %15 = sbr.rel (0) target = $region5
    $region4: #{tpu_custom_call.1} parent=1 // pred_region
      %s17 = ssub.s32 128, 128
      %18 = vsyncadd [#allocation5], %s17
      %s20 = sshll.u32 [#allocation4], 4
      %s21 = int_to_ptr.vmem [resolvable:$true] %s20
      %23 = dma.hbm_to_vmem [thread:$0]  %s0, 128, %s21, [#allocation5]
    $region5: #{tpu_custom_call.1} parent=1 // pred_fallthru
      _
    // Predicated region
    $region6: #{tpu_custom_call.1} parent=1 // pred_check
      _
    $region7: #{tpu_custom_call.1} parent=1 // pred_check_branch
      %25 = sbr.rel (0) target = $region9
    $region8: #{tpu_custom_call.1} parent=1 // pred_region
      %s27 = ssub.s32 2048, 2048
      %28 = vsyncadd [#allocation8], %s27
      %s29 = sshll.u32 [#allocation7], 4
      %s30 = int_to_ptr.vmem [resolvable:$true] %s29
      %35 = dma.hbm_to_vmem [thread:$0]  %s1, 2048, %s30, [#allocation8], 128, 128, 8
    $region9: #{tpu_custom_call.1} parent=1 // pred_fallthru
      _
    // Predicated region
    $region10: #{tpu_custom_call.1} parent=1 // pred_check
      _
    $region11: #{tpu_custom_call.1} parent=1 // pred_check_branch
      %37 = sbr.rel (0) target = $region13
    $region12: #{tpu_custom_call.1} parent=1 // pred_region
      %s39 = ssub.s32 2048, 2048
      %40 = vsyncadd [#allocation8], %s39
      %s41 = sshll.u32 [#allocation9], 4
      %s42 = int_to_ptr.vmem [resolvable:$true] %s41
      %47 = dma.hbm_to_vmem [thread:$0]  %s2, 2048, %s42, [#allocation8], 128, 128, 8
    $region13: #{tpu_custom_call.1} parent=1 // pred_fallthru
      _
    // Predicated region
    $region14: #{tpu_custom_call.1} parent=1 // pred_check
      _
    $region15: #{tpu_custom_call.1} parent=1 // pred_check_branch
      %49 = sbr.rel (0) target = $region17
    $region16: #{tpu_custom_call.1} parent=1 // pred_region
      %s51 = ssub.s32 2048, 2048
      %52 = vsyncadd [#allocation11], %s51
      %s53 = sshll.u32 [#allocation10], 4
      %s54 = int_to_ptr.vmem [resolvable:$true] %s53
      %59 = dma.hbm_to_vmem [thread:$0]  %s3, 2048, %s54, [#allocation11], 128, 128, 8
    $region17: #{tpu_custom_call.1} parent=1 // pred_fallthru
      _
    // Predicated region
    $region18: #{tpu_custom_call.1} parent=1 // pred_check
      _
    $region19: #{tpu_custom_call.1} parent=1 // pred_check_branch
      %61 = sbr.rel (0) target = $region21
    $region20: #{tpu_custom_call.1} parent=1 // pred_region
      %s63 = ssub.s32 64, 64
      %64 = vsyncadd [#allocation11], %s63
      %s66 = sshll.u32 [#allocation12], 4
      %s67 = int_to_ptr.vmem [resolvable:$true] %s66
      %69 = dma.hbm_to_vmem [thread:$0]  %s4, 64, %s67, [#allocation11]
    $region21: #{tpu_custom_call.1} parent=1 // pred_fallthru
      _
    // Predicated region
    $region22: #{tpu_custom_call.1} parent=1 // pred_check
      _
    $region23: #{tpu_custom_call.1} parent=1 // pred_check_branch
      %71 = sbr.rel (0) target = $region25
    $region24: #{tpu_custom_call.1} parent=1 // pred_region
      %72 = dma.done [#allocation5], 128
    $region25: #{tpu_custom_call.1} parent=1 // pred_fallthru
      _
    // Predicated region
    $region26: #{tpu_custom_call.1} parent=1 // pred_check
      _
    $region27: #{tpu_custom_call.1} parent=1 // pred_check_branch
      %74 = sbr.rel (0) target = $region29
    $region28: #{tpu_custom_call.1} parent=1 // pred_region
      %75 = dma.done [#allocation8], 2048
    $region29: #{tpu_custom_call.1} parent=1 // pred_fallthru
      _
    // Predicated region
    $region30: #{tpu_custom_call.1} parent=1 // pred_check
      _
    $region31: #{tpu_custom_call.1} parent=1 // pred_check_branch
      %77 = sbr.rel (0) target = $region33
    $region32: #{tpu_custom_call.1} parent=1 // pred_region
      %78 = dma.done [#allocation8], 2048
    $region33: #{tpu_custom_call.1} parent=1 // pred_fallthru
      _
    // Predicated region
    $region34: #{tpu_custom_call.1} parent=1 // pred_check
      _
    $region35: #{tpu_custom_call.1} parent=1 // pred_check_branch
      %80 = sbr.rel (0) target = $region37
    $region36: #{tpu_custom_call.1} parent=1 // pred_region
      %81 = dma.done [#allocation11], 2048
    $region37: #{tpu_custom_call.1} parent=1 // pred_fallthru
      _
    // Predicated region
    $region38: #{tpu_custom_call.1} parent=1 // pred_check
      _
    $region39: #{tpu_custom_call.1} parent=1 // pred_check_branch
      %83 = sbr.rel (0) target = $region41
    $region40: #{tpu_custom_call.1} parent=1 // pred_region
      %84 = dma.done [#allocation11], 64
    $region41: #{tpu_custom_call.1} parent=1 // pred_fallthru
      _
    %p85 = scmp.eq.s32.totalorder 0, 0
    // Predicated region
    $region42: #{tpu_custom_call.1} parent=1 // pred_check
      %p86 = pneg %p85
    $region43: #{tpu_custom_call.1} parent=1 // pred_check_branch
      %88 = sbr.rel (%p86) target = $region45
    $region44: #{tpu_custom_call.1} parent=1 // pred_region
      %v89 = vld [vmem:[#allocation9] sm:$0xff]
      %v90 = vld [vmem:[#allocation9 + $0x8] sm:$0xff]
      %v91 = vld [vmem:[#allocation9 + $0x10] sm:$0xff]
      %v92 = vld [vmem:[#allocation9 + $0x18] sm:$0xff]
      %v93 = vld [vmem:[#allocation9 + $0x20] sm:$0xff]
      %v94 = vld [vmem:[#allocation9 + $0x28] sm:$0xff]
      %v95 = vld [vmem:[#allocation9 + $0x30] sm:$0xff]
      %v96 = vld [vmem:[#allocation9 + $0x38] sm:$0xff]
      %v97 = vld [vmem:[#allocation9 + $0x40] sm:$0xff]
      %v98 = vld [vmem:[#allocation9 + $0x48] sm:$0xff]
      %v99 = vld [vmem:[#allocation9 + $0x50] sm:$0xff]
      %v100 = vld [vmem:[#allocation9 + $0x58] sm:$0xff]
      %v101 = vld [vmem:[#allocation9 + $0x60] sm:$0xff]
      %v102 = vld [vmem:[#allocation9 + $0x68] sm:$0xff]
      %v103 = vld [vmem:[#allocation9 + $0x70] sm:$0xff]
      %v104 = vld [vmem:[#allocation9 + $0x78] sm:$0xff]
      %v105 = vmax.f32 %v89, 0.0
      %v106 = vmax.f32 %v90, 0.0
      %v107 = vmax.f32 %v91, 0.0
      %v108 = vmax.f32 %v92, 0.0
      %v109 = vmax.f32 %v93, 0.0
      %v110 = vmax.f32 %v94, 0.0
      %v111 = vmax.f32 %v95, 0.0
      %v112 = vmax.f32 %v96, 0.0
      %v113 = vmax.f32 %v97, 0.0
      %v114 = vmax.f32 %v98, 0.0
      %v115 = vmax.f32 %v99, 0.0
      %v116 = vmax.f32 %v100, 0.0
      %v117 = vmax.f32 %v101, 0.0
      %v118 = vmax.f32 %v102, 0.0
      %v119 = vmax.f32 %v103, 0.0
      %v120 = vmax.f32 %v104, 0.0
      %v121 = vand.u32 2147483647, %v89
      %v122 = vand.u32 2147483647, %v90
      %v123 = vand.u32 2147483647, %v91
      %v124 = vand.u32 2147483647, %v92
      %v125 = vand.u32 2147483647, %v93
      %v126 = vand.u32 2147483647, %v94
      %v127 = vand.u32 2147483647, %v95
      %v128 = vand.u32 2147483647, %v96
      %v129 = vand.u32 2147483647, %v97
      %v130 = vand.u32 2147483647, %v98
      %v131 = vand.u32 2147483647, %v99
      %v132 = vand.u32 2147483647, %v100
      %v133 = vand.u32 2147483647, %v101
      %v134 = vand.u32 2147483647, %v102
      %v135 = vand.u32 2147483647, %v103
      %v136 = vand.u32 2147483647, %v104
      %v137 = vsub.f32 0.0, %v121
      %v138 = vsub.f32 0.0, %v122
      %v139 = vsub.f32 0.0, %v123
      %v140 = vsub.f32 0.0, %v124
      %v141 = vsub.f32 0.0, %v125
      %v142 = vsub.f32 0.0, %v126
      %v143 = vsub.f32 0.0, %v127
      %v144 = vsub.f32 0.0, %v128
      %v145 = vsub.f32 0.0, %v129
      %v146 = vsub.f32 0.0, %v130
      %v147 = vsub.f32 0.0, %v131
      %v148 = vsub.f32 0.0, %v132
      %v149 = vsub.f32 0.0, %v133
      %v150 = vsub.f32 0.0, %v134
      %v151 = vsub.f32 0.0, %v135
      %v152 = vsub.f32 0.0, %v136
      %v153 = vmul.f32 %v137, 1.442695
      %v154 = vpow.pop %v153
      %v155 = vmul.f32 %v138, 1.442695
      %v156 = vpow.pop %v155
      %v157 = vmul.f32 %v139, 1.442695
      %v158 = vpow.pop %v157
      %v159 = vmul.f32 %v140, 1.442695
      %v160 = vpow.pop %v159
      %v161 = vmul.f32 %v141, 1.442695
      %v162 = vpow.pop %v161
      %v163 = vmul.f32 %v142, 1.442695
      %v164 = vpow.pop %v163
      %v165 = vmul.f32 %v143, 1.442695
      %v166 = vpow.pop %v165
      %v167 = vmul.f32 %v144, 1.442695
      %v168 = vpow.pop %v167
      %v169 = vmul.f32 %v145, 1.442695
      %v170 = vpow.pop %v169
      %v171 = vmul.f32 %v146, 1.442695
      %v172 = vpow.pop %v171
      %v173 = vmul.f32 %v147, 1.442695
      %v174 = vpow.pop %v173
      %v175 = vmul.f32 %v148, 1.442695
      %v176 = vpow.pop %v175
      %v177 = vmul.f32 %v149, 1.442695
      %v178 = vpow.pop %v177
      %v179 = vmul.f32 %v150, 1.442695
      %v180 = vpow.pop %v179
      %v181 = vmul.f32 %v151, 1.442695
      %v182 = vpow.pop %v181
      %v183 = vmul.f32 %v152, 1.442695
      %v184 = vpow.pop %v183
      %v185 = vadd.f32 %v154, 1.0
      %v186 = vlog2.pop %v185
      %v187 = vmul.f32 %v186, 0.6931472
      %v188 = vmul.f32 -0.5, %v154
      %v189 = vadd.f32 %v188, 1.0
      %v190 = vmul.f32 %v189, %v154
      %v191 = vand.u32 2147483647, %v154
      %vm192 = vcmp.lt.f32.partialorder %v191, 0.0004427343
      %v193 = vsel %vm192, %v190, %v187
      %v194 = vadd.f32 %v156, 1.0
      %v195 = vlog2.pop %v194
      %v196 = vmul.f32 %v195, 0.6931472
      %v197 = vmul.f32 -0.5, %v156
      %v198 = vadd.f32 %v197, 1.0
      %v199 = vmul.f32 %v198, %v156
      %v200 = vand.u32 2147483647, %v156
      %vm201 = vcmp.lt.f32.partialorder %v200, 0.0004427343
      %v202 = vsel %vm201, %v199, %v196
      %v203 = vadd.f32 %v158, 1.0
      %v204 = vlog2.pop %v203
      %v205 = vmul.f32 %v204, 0.6931472
      %v206 = vmul.f32 -0.5, %v158
      %v207 = vadd.f32 %v206, 1.0
      %v208 = vmul.f32 %v207, %v158
      %v209 = vand.u32 2147483647, %v158
      %vm210 = vcmp.lt.f32.partialorder %v209, 0.0004427343
      %v211 = vsel %vm210, %v208, %v205
      %v212 = vadd.f32 %v160, 1.0
      %v213 = vlog2.pop %v212
      %v214 = vmul.f32 %v213, 0.6931472
      %v215 = vmul.f32 -0.5, %v160
      %v216 = vadd.f32 %v215, 1.0
      %v217 = vmul.f32 %v216, %v160
      %v218 = vand.u32 2147483647, %v160
      %vm219 = vcmp.lt.f32.partialorder %v218, 0.0004427343
      %v220 = vsel %vm219, %v217, %v214
      %v221 = vadd.f32 %v162, 1.0
      %v222 = vlog2.pop %v221
      %v223 = vmul.f32 %v222, 0.6931472
      %v224 = vmul.f32 -0.5, %v162
      %v225 = vadd.f32 %v224, 1.0
      %v226 = vmul.f32 %v225, %v162
      %v227 = vand.u32 2147483647, %v162
      %vm228 = vcmp.lt.f32.partialorder %v227, 0.0004427343
      %v229 = vsel %vm228, %v226, %v223
      %v230 = vadd.f32 %v164, 1.0
      %v231 = vlog2.pop %v230
      %v232 = vmul.f32 %v231, 0.6931472
      %v233 = vmul.f32 -0.5, %v164
      %v234 = vadd.f32 %v233, 1.0
      %v235 = vmul.f32 %v234, %v164
      %v236 = vand.u32 2147483647, %v164
      %vm237 = vcmp.lt.f32.partialorder %v236, 0.0004427343
      %v238 = vsel %vm237, %v235, %v232
      %v239 = vadd.f32 %v166, 1.0
      %v240 = vlog2.pop %v239
      %v241 = vmul.f32 %v240, 0.6931472
      %v242 = vmul.f32 -0.5, %v166
      %v243 = vadd.f32 %v242, 1.0
      %v244 = vmul.f32 %v243, %v166
      %v245 = vand.u32 2147483647, %v166
      %vm246 = vcmp.lt.f32.partialorder %v245, 0.0004427343
      %v247 = vsel %vm246, %v244, %v241
      %v248 = vadd.f32 %v168, 1.0
      %v249 = vlog2.pop %v248
      %v250 = vmul.f32 %v249, 0.6931472
      %v251 = vmul.f32 -0.5, %v168
      %v252 = vadd.f32 %v251, 1.0
      %v253 = vmul.f32 %v252, %v168
      %v254 = vand.u32 2147483647, %v168
      %vm255 = vcmp.lt.f32.partialorder %v254, 0.0004427343
      %v256 = vsel %vm255, %v253, %v250
      %v257 = vadd.f32 %v170, 1.0
      %v258 = vlog2.pop %v257
      %v259 = vmul.f32 %v258, 0.6931472
      %v260 = vmul.f32 -0.5, %v170
      %v261 = vadd.f32 %v260, 1.0
      %v262 = vmul.f32 %v261, %v170
      %v263 = vand.u32 2147483647, %v170
      %vm264 = vcmp.lt.f32.partialorder %v263, 0.0004427343
      %v265 = vsel %vm264, %v262, %v259
      %v266 = vadd.f32 %v172, 1.0
      %v267 = vlog2.pop %v266
      %v268 = vmul.f32 %v267, 0.6931472
      %v269 = vmul.f32 -0.5, %v172
      %v270 = vadd.f32 %v269, 1.0
      %v271 = vmul.f32 %v270, %v172
      %v272 = vand.u32 2147483647, %v172
      %vm273 = vcmp.lt.f32.partialorder %v272, 0.0004427343
      %v274 = vsel %vm273, %v271, %v268
      %v275 = vadd.f32 %v174, 1.0
      %v276 = vlog2.pop %v275
      %v277 = vmul.f32 %v276, 0.6931472
      %v278 = vmul.f32 -0.5, %v174
      %v279 = vadd.f32 %v278, 1.0
      %v280 = vmul.f32 %v279, %v174
      %v281 = vand.u32 2147483647, %v174
      %vm282 = vcmp.lt.f32.partialorder %v281, 0.0004427343
      %v283 = vsel %vm282, %v280, %v277
      %v284 = vadd.f32 %v176, 1.0
      %v285 = vlog2.pop %v284
      %v286 = vmul.f32 %v285, 0.6931472
      %v287 = vmul.f32 -0.5, %v176
      %v288 = vadd.f32 %v287, 1.0
      %v289 = vmul.f32 %v288, %v176
      %v290 = vand.u32 2147483647, %v176
      %vm291 = vcmp.lt.f32.partialorder %v290, 0.0004427343
      %v292 = vsel %vm291, %v289, %v286
      %v293 = vadd.f32 %v178, 1.0
      %v294 = vlog2.pop %v293
      %v295 = vmul.f32 %v294, 0.6931472
      %v296 = vmul.f32 -0.5, %v178
      %v297 = vadd.f32 %v296, 1.0
      %v298 = vmul.f32 %v297, %v178
      %v299 = vand.u32 2147483647, %v178
      %vm300 = vcmp.lt.f32.partialorder %v299, 0.0004427343
      %v301 = vsel %vm300, %v298, %v295
      %v302 = vadd.f32 %v180, 1.0
      %v303 = vlog2.pop %v302
      %v304 = vmul.f32 %v303, 0.6931472
      %v305 = vmul.f32 -0.5, %v180
      %v306 = vadd.f32 %v305, 1.0
      %v307 = vmul.f32 %v306, %v180
      %v308 = vand.u32 2147483647, %v180
      %vm309 = vcmp.lt.f32.partialorder %v308, 0.0004427343
      %v310 = vsel %vm309, %v307, %v304
      %v311 = vadd.f32 %v182, 1.0
      %v312 = vlog2.pop %v311
      %v313 = vmul.f32 %v312, 0.6931472
      %v314 = vmul.f32 -0.5, %v182
      %v315 = vadd.f32 %v314, 1.0
      %v316 = vmul.f32 %v315, %v182
      %v317 = vand.u32 2147483647, %v182
      %vm318 = vcmp.lt.f32.partialorder %v317, 0.0004427343
      %v319 = vsel %vm318, %v316, %v313
      %v320 = vadd.f32 %v184, 1.0
      %v321 = vlog2.pop %v320
      %v322 = vmul.f32 %v321, 0.6931472
      %v323 = vmul.f32 -0.5, %v184
      %v324 = vadd.f32 %v323, 1.0
      %v325 = vmul.f32 %v324, %v184
      %v326 = vand.u32 2147483647, %v184
      %vm327 = vcmp.lt.f32.partialorder %v326, 0.0004427343
      %v328 = vsel %vm327, %v325, %v322
      %v329 = vadd.f32 %v105, %v193
      %v330 = vadd.f32 %v106, %v202
      %v331 = vadd.f32 %v107, %v211
      %v332 = vadd.f32 %v108, %v220
      %v333 = vadd.f32 %v109, %v229
      %v334 = vadd.f32 %v110, %v238
      %v335 = vadd.f32 %v111, %v247
      %v336 = vadd.f32 %v112, %v256
      %v337 = vadd.f32 %v113, %v265
      %v338 = vadd.f32 %v114, %v274
      %v339 = vadd.f32 %v115, %v283
      %v340 = vadd.f32 %v116, %v292
      %v341 = vadd.f32 %v117, %v301
      %v342 = vadd.f32 %v118, %v310
      %v343 = vadd.f32 %v119, %v319
      %v344 = vadd.f32 %v120, %v328
      %v345 = vld [vmem:[#allocation7] sm:$0xff]
      %v346 = vld [vmem:[#allocation7 + $0x8] sm:$0xff]
      %v347 = vld [vmem:[#allocation7 + $0x10] sm:$0xff]
      %v348 = vld [vmem:[#allocation7 + $0x18] sm:$0xff]
      %v349 = vld [vmem:[#allocation7 + $0x20] sm:$0xff]
      %v350 = vld [vmem:[#allocation7 + $0x28] sm:$0xff]
      %v351 = vld [vmem:[#allocation7 + $0x30] sm:$0xff]
      %v352 = vld [vmem:[#allocation7 + $0x38] sm:$0xff]
      %v353 = vld [vmem:[#allocation7 + $0x40] sm:$0xff]
      %v354 = vld [vmem:[#allocation7 + $0x48] sm:$0xff]
      %v355 = vld [vmem:[#allocation7 + $0x50] sm:$0xff]
      %v356 = vld [vmem:[#allocation7 + $0x58] sm:$0xff]
      %v357 = vld [vmem:[#allocation7 + $0x60] sm:$0xff]
      %v358 = vld [vmem:[#allocation7 + $0x68] sm:$0xff]
      %v359 = vld [vmem:[#allocation7 + $0x70] sm:$0xff]
      %v360 = vld [vmem:[#allocation7 + $0x78] sm:$0xff]
      %v361 = vld [vmem:[#allocation10] sm:$0xff]
      %v362 = vld [vmem:[#allocation10 + $0x8] sm:$0xff]
      %v363 = vld [vmem:[#allocation10 + $0x10] sm:$0xff]
      %v364 = vld [vmem:[#allocation10 + $0x18] sm:$0xff]
      %v365 = vld [vmem:[#allocation10 + $0x20] sm:$0xff]
      %v366 = vld [vmem:[#allocation10 + $0x28] sm:$0xff]
      %v367 = vld [vmem:[#allocation10 + $0x30] sm:$0xff]
      %v368 = vld [vmem:[#allocation10 + $0x38] sm:$0xff]
      %v369 = vld [vmem:[#allocation10 + $0x40] sm:$0xff]
      %v370 = vld [vmem:[#allocation10 + $0x48] sm:$0xff]
      %v371 = vld [vmem:[#allocation10 + $0x50] sm:$0xff]
      %v372 = vld [vmem:[#allocation10 + $0x58] sm:$0xff]
      %v373 = vld [vmem:[#allocation10 + $0x60] sm:$0xff]
      %v374 = vld [vmem:[#allocation10 + $0x68] sm:$0xff]
      %v375 = vld [vmem:[#allocation10 + $0x70] sm:$0xff]
      %v376 = vld [vmem:[#allocation10 + $0x78] sm:$0xff]
      %v377 = vmul.f32 %v361, %v329
      %v378 = vmul.f32 %v362, %v330
      %v379 = vmul.f32 %v363, %v331
      %v380 = vmul.f32 %v364, %v332
      %v381 = vmul.f32 %v365, %v333
      %v382 = vmul.f32 %v366, %v334
      %v383 = vmul.f32 %v367, %v335
      %v384 = vmul.f32 %v368, %v336
      %v385 = vmul.f32 %v369, %v337
      %v386 = vmul.f32 %v370, %v338
      %v387 = vmul.f32 %v371, %v339
      %v388 = vmul.f32 %v372, %v340
      %v389 = vmul.f32 %v373, %v341
      %v390 = vmul.f32 %v374, %v342
      %v391 = vmul.f32 %v375, %v343
      %v392 = vmul.f32 %v376, %v344
      %v393 = vadd.f32 %v345, %v377
      %v394 = vadd.f32 %v346, %v378
      %v395 = vadd.f32 %v347, %v379
      %v396 = vadd.f32 %v348, %v380
      %v397 = vadd.f32 %v349, %v381
      %v398 = vadd.f32 %v350, %v382
      %v399 = vadd.f32 %v351, %v383
      %v400 = vadd.f32 %v352, %v384
      %v401 = vadd.f32 %v353, %v385
      %v402 = vadd.f32 %v354, %v386
      %v403 = vadd.f32 %v355, %v387
      %v404 = vadd.f32 %v356, %v388
      %v405 = vadd.f32 %v357, %v389
      %v406 = vadd.f32 %v358, %v390
      %v407 = vadd.f32 %v359, %v391
      %v408 = vadd.f32 %v360, %v392
      %409 = vst [vmem:[#allocation2] sm:$0xff] %v393
      %410 = vst [vmem:[#allocation2 + $0x8] sm:$0xff] %v394
      %411 = vst [vmem:[#allocation2 + $0x10] sm:$0xff] %v395
      %412 = vst [vmem:[#allocation2 + $0x18] sm:$0xff] %v396
      %413 = vst [vmem:[#allocation2 + $0x20] sm:$0xff] %v397
      %414 = vst [vmem:[#allocation2 + $0x28] sm:$0xff] %v398
      %415 = vst [vmem:[#allocation2 + $0x30] sm:$0xff] %v399
      %416 = vst [vmem:[#allocation2 + $0x38] sm:$0xff] %v400
      %417 = vst [vmem:[#allocation2 + $0x40] sm:$0xff] %v401
      %418 = vst [vmem:[#allocation2 + $0x48] sm:$0xff] %v402
      %419 = vst [vmem:[#allocation2 + $0x50] sm:$0xff] %v403
      %420 = vst [vmem:[#allocation2 + $0x58] sm:$0xff] %v404
      %421 = vst [vmem:[#allocation2 + $0x60] sm:$0xff] %v405
      %422 = vst [vmem:[#allocation2 + $0x68] sm:$0xff] %v406
      %423 = vst [vmem:[#allocation2 + $0x70] sm:$0xff] %v407
      %424 = vst [vmem:[#allocation2 + $0x78] sm:$0xff] %v408
      %v425 = vld [vmem:[#allocation12] sm:$0x1]
      %v426 = vld [vmem:[#allocation12 + $0x1] sm:$0x1]
      %v427 = vld [vmem:[#allocation12 + $0x2] sm:$0x1]
      %v428 = vmax.f32 %v426, 0.0
      %v429 = vand.u32 2147483647, %v426
      %v430 = vsub.f32 0.0, %v429
      %v431 = vmul.f32 %v430, 1.442695
      %v432 = vpow.pop %v431
      %v433 = vadd.f32 %v432, 1.0
      %v434 = vlog2.pop %v433
      %v435 = vmul.f32 %v434, 0.6931472
      %v436 = vmul.f32 -0.5, %v432
      %v437 = vadd.f32 %v436, 1.0
      %v438 = vmul.f32 %v437, %v432
      %v439 = vand.u32 2147483647, %v432
      %vm440 = vcmp.lt.f32.partialorder %v439, 0.0004427343
      %v441 = vsel %vm440, %v438, %v435
      %v442 = vadd.f32 %v428, %v441
      %v443 = vmul.f32 %v427, %v442
      %v444 = vadd.f32 %v425, %v443
      %445 = vst [vmem:[#allocation3] sm:$0x1] %v444
    $region45: #{tpu_custom_call.1} parent=1 // pred_fallthru
      _
    %v446 = vld [vmem:[#allocation4] sm:$0xff]
    %v447 = vld [vmem:[#allocation2] sm:$0xff]
    %v448 = vld [vmem:[#allocation2 + $0x8] sm:$0xff]
    %v449 = vld [vmem:[#allocation2 + $0x10] sm:$0xff]
    %v450 = vld [vmem:[#allocation2 + $0x18] sm:$0xff]
    %v451 = vld [vmem:[#allocation2 + $0x20] sm:$0xff]
    %v452 = vld [vmem:[#allocation2 + $0x28] sm:$0xff]
    %v453 = vld [vmem:[#allocation2 + $0x30] sm:$0xff]
    %v454 = vld [vmem:[#allocation2 + $0x38] sm:$0xff]
    %v455 = vld [vmem:[#allocation2 + $0x40] sm:$0xff]
    %v456 = vld [vmem:[#allocation2 + $0x48] sm:$0xff]
    %v457 = vld [vmem:[#allocation2 + $0x50] sm:$0xff]
    %v458 = vld [vmem:[#allocation2 + $0x58] sm:$0xff]
    %v459 = vld [vmem:[#allocation2 + $0x60] sm:$0xff]
    %v460 = vld [vmem:[#allocation2 + $0x68] sm:$0xff]
    %v461 = vld [vmem:[#allocation2 + $0x70] sm:$0xff]
    %v462 = vld [vmem:[#allocation2 + $0x78] sm:$0xff]
    %v463 = vld [vmem:[#allocation3] sm:$0x1]
    %v465 = vlaneseq
    %v466 = vshrl.u32 %v465, 7
    %v467 = vsub.s32 0, %v466
    %v468 = vrot.slane %v463, %v467
    %470 = vmatprep.subr.mxu0 0.0
    %471 = vmatpush1.xpose.msra.mxu0 %v447
    %472 = vmatprep.subr.mxu0 0.0
    %473 = vmatpush1.xpose.msra.mxu0 %v448
    %474 = vmatprep.subr.mxu0 0.0
    %475 = vmatpush1.xpose.msra.mxu0 %v449
    %476 = vmatprep.subr.mxu0 0.0
    %477 = vmatpush1.xpose.msra.mxu0 %v450
    %478 = vmatprep.subr.mxu0 0.0
    %479 = vmatpush1.xpose.msra.mxu0 %v451
    %480 = vmatprep.subr.mxu0 0.0
    %481 = vmatpush1.xpose.msra.mxu0 %v452
    %482 = vmatprep.subr.mxu0 0.0
    %483 = vmatpush1.xpose.msra.mxu0 %v453
    %484 = vmatprep.subr.mxu0 0.0
    %485 = vmatpush1.xpose.msra.mxu0 %v454
    %486 = vmatprep.subr.mxu0 0.0
    %487 = vmatpush1.xpose.msra.mxu0 %v455
    %488 = vmatprep.subr.mxu0 0.0
    %489 = vmatpush1.xpose.msra.mxu0 %v456
    %490 = vmatprep.subr.mxu0 0.0
    %491 = vmatpush1.xpose.msra.mxu0 %v457
    %492 = vmatprep.subr.mxu0 0.0
    %493 = vmatpush1.xpose.msra.mxu0 %v458
    %494 = vmatprep.subr.mxu0 0.0
    %495 = vmatpush1.xpose.msra.mxu0 %v459
    %496 = vmatprep.subr.mxu0 0.0
    %497 = vmatpush1.xpose.msra.mxu0 %v460
    %498 = vmatprep.subr.mxu0 0.0
    %499 = vmatpush1.xpose.msra.mxu0 %v461
    %500 = vmatprep.subr.mxu0 0.0
    %501 = vmatpush1.xpose.msra.mxu0 %v462
    %502 = vmatprep.subr.mxu0 0.0
    %503 = vmatpush1.xpose.msra.mxu0 0.0
    %504 = vmatprep.subr.mxu0 0.0
    %505 = vmatpush1.xpose.msra.mxu0 0.0
    %506 = vmatprep.subr.mxu0 0.0
    %507 = vmatpush1.xpose.msra.mxu0 0.0
    %508 = vmatprep.subr.mxu0 0.0
    %509 = vmatpush1.xpose.msra.mxu0 0.0
    %510 = vmatprep.subr.mxu0 0.0
    %511 = vmatpush1.xpose.msra.mxu0 0.0
    %512 = vmatprep.subr.mxu0 0.0
    %513 = vmatpush1.xpose.msra.mxu0 0.0
    %514 = vmatprep.subr.mxu0 0.0
    %515 = vmatpush1.xpose.msra.mxu0 0.0
    %516 = vmatprep.subr.mxu0 0.0
    %517 = vmatpush1.xpose.msra.mxu0 0.0
    %518 = vmatprep.subr.mxu0 0.0
    %519 = vmatpush1.xpose.msra.mxu0 0.0
    %520 = vmatprep.subr.mxu0 0.0
    %521 = vmatpush1.xpose.msra.mxu0 0.0
    %522 = vmatprep.subr.mxu0 0.0
    %523 = vmatpush1.xpose.msra.mxu0 0.0
    %524 = vmatprep.subr.mxu0 0.0
    %525 = vmatpush1.xpose.msra.mxu0 0.0
    %526 = vmatprep.subr.mxu0 0.0
    %527 = vmatpush1.xpose.msra.mxu0 0.0
    %528 = vmatprep.subr.mxu0 0.0
    %529 = vmatpush1.xpose.msra.mxu0 0.0
    %530 = vmatprep.subr.mxu0 0.0
    %531 = vmatpush1.xpose.msra.mxu0 0.0
    %532 = vmatprep.subr.mxu0 0.0
    %533 = vmatpush1.xpose.msra.mxu0 0.0
    %534 = vmatprep.mubr.f32.mxu0 0.0
    %535 = vmatmul.mubr.f32.gmra.mrb[0].mxu0 %v446
    %v536 = vpop.f32.mrb[0].mxu0
    %v537 = vadd.f32 %v468, %v536
    %v538 = vpop.f32.mrb[0].mxu0
    %539 = vdwg.mxu0
    %540 = vst [vmem:[#allocation13] sm:$0xff] %v537
    // Predicated region
    $region46: #{tpu_custom_call.1} parent=1 // pred_check
      _
    $region47: #{tpu_custom_call.1} parent=1 // pred_check_branch
      %542 = sbr.rel (0) target = $region49
    $region48: #{tpu_custom_call.1} parent=1 // pred_region
      %s544 = ssub.s32 128, 128
      %545 = vsyncadd [#allocation6], %s544
      %s547 = sshll.u32 [#allocation13], 4
      %s548 = int_to_ptr.vmem [resolvable:$true] %s547
      %550 = dma.vmem_to_hbm [thread:$0]  %s548, 128, %s5, [#allocation6]
    $region49: #{tpu_custom_call.1} parent=1 // pred_fallthru
      _
    // Predicated region
    $region50: #{tpu_custom_call.1} parent=1 // pred_check
      _
    $region51: #{tpu_custom_call.1} parent=1 // pred_check_branch
      %552 = sbr.rel (0) target = $region53
    $region52: #{tpu_custom_call.1} parent=1 // pred_region
      %553 = dma.done [#allocation6], 128
    $region53: #{tpu_custom_call.1} parent=1 // pred_fallthru
      _
    %554 = vsyncpa [#allocation5], 1
    %555 = vsyncpa [#allocation8], 1
    %556 = vsyncpa [#allocation11], 1
    %557 = vsyncpa [#allocation6], 1

</llo_original>
